<compile_context>
chip_gen: v7x
topology: tpu7x:2x2x1
jax: 0.10.0
libtpu: 0.0.40
codegen_flags: <defaults>
</compile_context>

<pallas_src>
import functools

import jax
import jax.numpy as jnp
from jax.experimental import pallas as pl
from jax.experimental.pallas import tpu as pltpu

_LANE = 128            # TPU vreg lane width.
_MAX_TILE_ROWS = 1024  # rows per grid step; 1024 x 128 f32 = 512 KiB per operand.


def _round_up(a, b):
    return (a + b - 1) // b * b


def _add_kernel(x_ref, pe_ref, o_ref):
    # Eval mode: y = x + pe (stay in the input dtype; bf16-safe on v6e/v7x).
    o_ref[...] = (x_ref[...] + pe_ref[...]).astype(o_ref.dtype)


def _add_dropout_kernel(u_ref, x_ref, pe_ref, o_ref, *, p, scale):
    # Training mode: y = where(u >= p, x + pe, 0) * (1 / (1 - p)).
    y = x_ref[...] + pe_ref[...]
    keep = u_ref[...] >= jnp.float32(p)          # drop with probability p
    y = jnp.where(keep, y, 0.0) * jnp.asarray(scale, y.dtype)
    o_ref[...] = y.astype(o_ref.dtype)


def positional_encoding_forward(
    x,
    pe,
    *,
    dropout_p=0.1,
    training=True,
    rng_key=None,
    max_tile_rows=_MAX_TILE_ROWS,
    min_pallas_elements=0,
):
    """x: (seq_len, batch, d_model), pe: (seq_len, 1, d_model)."""
    S, B, D = x.shape
    assert pe.shape == (S, 1, D)
    total = S * B * D

    apply_dropout = training and dropout_p > 0.0
    if apply_dropout and dropout_p >= 1.0:       # degenerate: drop everything
        return jnp.zeros_like(x)
    if apply_dropout and rng_key is None:
        rng_key = jax.random.PRNGKey(0)

    # For truly tiny problems the pallas_call fixed overhead dominates; let XLA
    # fuse a plain add + dropout instead (caller opts in via min_pallas_elements).
    if total < min_pallas_elements:
        y = (x + pe).astype(x.dtype)
        if apply_dropout:
            keep = jax.random.bernoulli(rng_key, 1.0 - dropout_p, y.shape)
            y = (jnp.where(keep, y, 0.0) * (1.0 / (1.0 - dropout_p))).astype(x.dtype)
        return y

    # ---- layout plumbing: lane-dense (rows, 128) slab ----------------------
    pe_b = jnp.broadcast_to(pe, (S, B, D)).astype(x.dtype)
    x_flat = x.reshape(-1)
    pe_flat = pe_b.reshape(-1)

    rows = pl.cdiv(total, _LANE)
    tile_rows = min(max_tile_rows, _round_up(rows, 8))  # (8, 128)-aligned tiles
    rows_padded = _round_up(rows, tile_rows)
    pad = rows_padded * _LANE - total
    if pad:
        x_flat = jnp.pad(x_flat, (0, pad))
        pe_flat = jnp.pad(pe_flat, (0, pad))
    x2 = x_flat.reshape(rows_padded, _LANE)
    pe2 = pe_flat.reshape(rows_padded, _LANE)

    grid = (rows_padded // tile_rows,)
    blk = pl.BlockSpec((tile_rows, _LANE), lambda i: (i, 0))
    cparams = pltpu.CompilerParams(
        dimension_semantics=("parallel",),       # megacore split on v7x
        vmem_limit_bytes=32 * 1024 * 1024,       # safe on v5e/v6e/v7x, ample headroom
    )
    out_shape = jax.ShapeDtypeStruct((rows_padded, _LANE), x.dtype)

    if apply_dropout:
        u = jax.random.uniform(rng_key, (rows_padded, _LANE), dtype=jnp.float32)
        kernel = functools.partial(
            _add_dropout_kernel, p=float(dropout_p), scale=1.0 / (1.0 - dropout_p)
        )
        out2 = pl.pallas_call(
            kernel,
            out_shape=out_shape,
            grid=grid,
            in_specs=[blk, blk, blk],
            out_specs=blk,
            compiler_params=cparams,
        )(u, x2, pe2)
    else:
        out2 = pl.pallas_call(
            _add_kernel,
            out_shape=out_shape,
            grid=grid,
            in_specs=[blk, blk],
            out_specs=blk,
            compiler_params=cparams,
        )(x2, pe2)

    return out2.reshape(-1)[:total].reshape(S, B, D)


if __name__ == "__main__":
    # Module shapes: d_model=32, seq_len=8, batch=2 (seq-first layout).
    S, B, D = 8, 2, 32
    key = jax.random.PRNGKey(0)
    kx, kpe, kdrop = jax.random.split(key, 3)

    x = jax.random.normal(kx, (S, B, D), dtype=jnp.float32)
    # Deterministic stand-in for nn.Parameter(torch.randn(seq_len, 1, d_model)).
    pe = jax.random.normal(kpe, (S, 1, D), dtype=jnp.float32)
    ref = x + pe

    # Eval mode: deterministic, must match the pure-JAX reference exactly.
    out_eval = jax.block_until_ready(
        positional_encoding_forward(x, pe, dropout_p=0.1, training=False)
    )
    assert out_eval.shape == (S, B, D)
    assert jnp.allclose(out_eval, ref, atol=1e-6), "eval-mode mismatch"

    # Training mode: every element is either 0 (dropped) or (x+pe)/(1-p) (kept).
    p = 0.1
    out_train = jax.block_until_ready(
        positional_encoding_forward(x, pe, dropout_p=p, training=True, rng_key=kdrop)
    )
    assert out_train.shape == (S, B, D)
    scaled = ref / (1.0 - p)
    ok = jnp.isclose(out_train, 0.0, atol=1e-6) | jnp.isclose(
        out_train, scaled, rtol=1e-5, atol=1e-5
    )
    assert bool(jnp.all(ok)), "training-mode dropout semantics mismatch"

    # Slightly larger shape to exercise a multi-step (pipelined) grid.
    S2, B2, D2 = 8, 16, 128
    x2 = jax.random.normal(kx, (S2, B2, D2), dtype=jnp.float32)
    pe2 = jax.random.normal(kpe, (S2, 1, D2), dtype=jnp.float32)
    out2 = jax.block_until_ready(
        positional_encoding_forward(
            x2, pe2, dropout_p=0.1, training=False, max_tile_rows=64
        )
    )
    assert jnp.allclose(out2, x2 + pe2, atol=1e-6), "multi-tile eval mismatch"

    # Ragged total (not a multiple of 128) to exercise the pad/unpad path.
    S3, B3, D3 = 7, 3, 32
    x3 = jax.random.normal(kx, (S3, B3, D3), dtype=jnp.float32)
    pe3 = jax.random.normal(kpe, (S3, 1, D3), dtype=jnp.float32)
    out3 = jax.block_until_ready(
        positional_encoding_forward(x3, pe3, dropout_p=0.1, training=False)
    )
    assert jnp.allclose(out3, x3 + pe3, atol=1e-6), "ragged-shape eval mismatch"

    print("KERNEL_OK")
</pallas_src>

<mosaic_0001>
module attributes {stable_mosaic.version = 11 : i64} {
  func.func @_add_kernel(%arg0: i32, %arg1: memref<8x128xf32, #tpu.memory_space<vmem>>, %arg2: memref<8x128xf32, #tpu.memory_space<vmem>>, %arg3: memref<8x128xf32, #tpu.memory_space<vmem>>) attributes {dimension_semantics = [#tpu.dimension_semantics<parallel>], iteration_bounds = array<i64: 1>, scalar_prefetch = 0 : i64, scratch_operands = 0 : i64, tpu.core_type = #tpu.core_type<tc>, window_params = [{transform_indices = @transform_0, window_bounds = array<i64: 8, 128>}, {transform_indices = @transform_1, window_bounds = array<i64: 8, 128>}, {transform_indices = @transform_2, window_bounds = array<i64: 8, 128>}]} {
    %c0 = arith.constant 0 : index
    %c0_0 = arith.constant 0 : index
    %0 = vector.load %arg1[%c0, %c0_0] : memref<8x128xf32, #tpu.memory_space<vmem>>, vector<8x128xf32>
    %c0_1 = arith.constant 0 : index
    %c0_2 = arith.constant 0 : index
    %1 = vector.load %arg2[%c0_1, %c0_2] : memref<8x128xf32, #tpu.memory_space<vmem>>, vector<8x128xf32>
    %2 = arith.addf %0, %1 : vector<8x128xf32>
    %c0_3 = arith.constant 0 : index
    %c0_4 = arith.constant 0 : index
    %3 = vector.load %arg3[%c0_3, %c0_4] : memref<8x128xf32, #tpu.memory_space<vmem>>, vector<8x128xf32>
    tpu.vector_store %arg3[%c0_3, %c0_4], %2 {strides = array<i32>} : memref<8x128xf32, #tpu.memory_space<vmem>>, vector<8x128xf32>,
    return
  }
  func.func @transform_0(%arg0: i32) -> (i32, i32) {
    %c0_i32 = arith.constant 0 : i32
    %c0_i32_0 = arith.constant 0 : i32
    return %arg0, %c0_i32 : i32, i32
  }
  func.func @transform_1(%arg0: i32) -> (i32, i32) {
    %c0_i32 = arith.constant 0 : i32
    %c0_i32_0 = arith.constant 0 : i32
    return %arg0, %c0_i32 : i32, i32
  }
  func.func @transform_2(%arg0: i32) -> (i32, i32) {
    %c0_i32 = arith.constant 0 : i32
    %c0_i32_0 = arith.constant 0 : i32
    return %arg0, %c0_i32 : i32, i32
  }
}

</mosaic_0001>

<llo_original>
// kernel: tpu_custom_call.1
$region0: #{tpu_custom_call.1}
  #allocation0 [shape = 'u32[]', space=smem, size = 0x4, offset = 0x4, fixed_abs, tag = 'smem constant byte address 0x4 - core index']
  #allocation1 [shape = 'u32[144,128]{1,0:T(1,128)}', space=vmem, size = 0x12000, scoped, tag = 'internal scratch']
  %s0 = inlined_call_operand.hbm [shape: f32[8,128], index: 0, kind: input, shape index: {}]
  %s1 = inlined_call_operand.hbm [shape: f32[8,128], index: 1, kind: input, shape index: {}]
  %s2 = inlined_call_operand.hbm [shape: f32[8,128], index: 2, kind: output, shape index: {}]
  %s3 = sld [smem:[#allocation0]]
  $region26: #{tpu_custom_call.1} parent=0
    _
  %s5 = ssub.s32 1, %s3
  %s6 = scalar_select 0, %s5, %s3
  $region1: #{tpu_custom_call.1} parent=0
    #allocation2 [shape = 'u8[4096]{0}', space=vmem, size = 0x1000, scoped, tag = 'input window, operand 0, single buffered']
    #allocation3 [shape = 's32[1]{0}', space=sflag, size = 0x4, scoped, tag = 'scoped memory for tpu_custom_call.1']
    #allocation4 [shape = 's32[1]{0}', space=sflag, size = 0x4, scoped, tag = 'scoped memory for tpu_custom_call.1']
    #allocation5 [shape = 'u8[4096]{0}', space=vmem, size = 0x1000, scoped, tag = 'input window, operand 1, single buffered']
    #allocation6 [shape = 's32[1]{0}', space=sflag, size = 0x4, scoped, tag = 'scoped memory for tpu_custom_call.1']
    #allocation7 [shape = 'u8[4096]{0}', space=vmem, size = 0x1000, scoped, tag = 'output window, operand 0, single buffered']
    %7 = vsyncpa [#allocation3], 0
    %8 = vsyncpa [#allocation6], 0
    %9 = vsyncpa [#allocation4], 0
    // Predicated region
    $region2: #{tpu_custom_call.1} parent=1 // pred_check
      _
    $region3: #{tpu_custom_call.1} parent=1 // pred_check_branch
      %11 = sbr.rel (0) target = $region5
    $region4: #{tpu_custom_call.1} parent=1 // pred_region
      %s13 = ssub.s32 128, 128
      %14 = vsyncadd [#allocation3], %s13
      %s16 = sshll.u32 [#allocation2], 4
      %s17 = int_to_ptr.vmem [resolvable:$true] %s16
      %19 = dma.hbm_to_vmem [thread:$0]  %s0, 128, %s17, [#allocation3]
    $region5: #{tpu_custom_call.1} parent=1 // pred_fallthru
      _
    // Predicated region
    $region6: #{tpu_custom_call.1} parent=1 // pred_check
      _
    $region7: #{tpu_custom_call.1} parent=1 // pred_check_branch
      %21 = sbr.rel (0) target = $region9
    $region8: #{tpu_custom_call.1} parent=1 // pred_region
      %s23 = ssub.s32 128, 128
      %24 = vsyncadd [#allocation6], %s23
      %s26 = sshll.u32 [#allocation5], 4
      %s27 = int_to_ptr.vmem [resolvable:$true] %s26
      %29 = dma.hbm_to_vmem [thread:$0]  %s1, 128, %s27, [#allocation6]
    $region9: #{tpu_custom_call.1} parent=1 // pred_fallthru
      _
    // Predicated region
    $region10: #{tpu_custom_call.1} parent=1 // pred_check
      _
    $region11: #{tpu_custom_call.1} parent=1 // pred_check_branch
      %31 = sbr.rel (0) target = $region13
    $region12: #{tpu_custom_call.1} parent=1 // pred_region
      %32 = dma.done [#allocation3], 128
    $region13: #{tpu_custom_call.1} parent=1 // pred_fallthru
      _
    // Predicated region
    $region14: #{tpu_custom_call.1} parent=1 // pred_check
      _
    $region15: #{tpu_custom_call.1} parent=1 // pred_check_branch
      %34 = sbr.rel (0) target = $region17
    $region16: #{tpu_custom_call.1} parent=1 // pred_region
      %35 = dma.done [#allocation6], 128
    $region17: #{tpu_custom_call.1} parent=1 // pred_fallthru
      _
    %v36 = vld [vmem:[#allocation2] sm:$0xff]
    %v37 = vld [vmem:[#allocation5] sm:$0xff]
    %v38 = vadd.f32 %v36, %v37
    %39 = vst [vmem:[#allocation7] sm:$0xff] %v38
    // Predicated region
    $region18: #{tpu_custom_call.1} parent=1 // pred_check
      _
    $region19: #{tpu_custom_call.1} parent=1 // pred_check_branch
      %41 = sbr.rel (0) target = $region21
    $region20: #{tpu_custom_call.1} parent=1 // pred_region
      %s43 = ssub.s32 128, 128
      %44 = vsyncadd [#allocation4], %s43
      %s46 = sshll.u32 [#allocation7], 4
      %s47 = int_to_ptr.vmem [resolvable:$true] %s46
      %49 = dma.vmem_to_hbm [thread:$0]  %s47, 128, %s2, [#allocation4]
    $region21: #{tpu_custom_call.1} parent=1 // pred_fallthru
      _
    // Predicated region
    $region22: #{tpu_custom_call.1} parent=1 // pred_check
      _
    $region23: #{tpu_custom_call.1} parent=1 // pred_check_branch
      %51 = sbr.rel (0) target = $region25
    $region24: #{tpu_custom_call.1} parent=1 // pred_region
      %52 = dma.done [#allocation4], 128
    $region25: #{tpu_custom_call.1} parent=1 // pred_fallthru
      _
    %53 = vsyncpa [#allocation3], 1
    %54 = vsyncpa [#allocation6], 1
    %55 = vsyncpa [#allocation4], 1

</llo_original>
